<compile_context>
chip_gen: v5e
topology: v5e:2x2
jax: 0.10.0
libtpu: 0.0.40
codegen_flags: <defaults>
</compile_context>

<pallas_src>
import functools

import jax
import jax.numpy as jnp
import numpy as np
from jax.experimental import pallas as pl
from jax.experimental.pallas import tpu as pltpu

IGNORE_INDEX = -1
THRESH = 0.7
MIN_KEPT = 256
MAX_TILE_N = 32768         # pixels per grid step (lane axis); ~2.6 MB VMEM working set


def _round_up(x, m):
    return ((x + m - 1) // m) * m


def _pick_tile(hw):
    """Pick a lane tile (multiple of 128) and padded pixel length.

    Prefer the largest multiple-of-128 divisor of round_up(hw,128) (no extra
    padding of pred); fall back to a big tile with a small pad for awkward
    (e.g. prime-factor) sizes so the grid never degenerates to 128-wide steps.
    """
    hw128 = _round_up(hw, 128)
    tile_n = 128
    for t in range(min(MAX_TILE_N, hw128), 127, -128):
        if hw128 % t == 0:
            tile_n = t
            break
    if tile_n < min(1024, hw128):            # divisor too small -> accept padding
        tile_n = min(MAX_TILE_N, hw128)
    hw_pad = _round_up(hw128, tile_n)
    return tile_n, hw_pad


# ----------------------------------------------------------------------------
# Kernel 1: per-pixel statistics in (C, N) layout -> prob row + weight/NLL rows
# ----------------------------------------------------------------------------
def _stats_kernel(pred_ref, tgt_ref, w_ref, prob_ref, wrows_ref, *, ignore_index):
    logits = pred_ref[...].astype(jnp.float32)             # (C, TN)
    tgt = tgt_ref[...]                                      # (1, TN) int32
    valid = tgt != ignore_index                             # (1, TN) bool
    tgt_c = jnp.where(valid, tgt, 0)                        # clamp ignored -> class 0

    # numerically-stable softmax over the class (sublane) axis
    m = jnp.max(logits, axis=0, keepdims=True)              # (1, TN)
    shifted = logits - m                                    # (C, TN)
    ex = jnp.exp(shifted)                                   # (C, TN)  (EUP)
    s = jnp.sum(ex, axis=0, keepdims=True)                  # (1, TN)

    class_ids = jax.lax.broadcasted_iota(jnp.int32, logits.shape, 0)  # (C, TN)
    onehot = (class_ids == tgt_c).astype(jnp.float32)                  # (C, TN)

    shifted_t = jnp.sum(shifted * onehot, axis=0, keepdims=True)       # (1, TN)
    ex_t = jnp.sum(ex * onehot, axis=0, keepdims=True)                 # (1, TN)
    w_t = jnp.sum(w_ref[...] * onehot, axis=0, keepdims=True)          # (1, TN)

    prob_t = ex_t / s                                       # softmax prob at target
    nll_t = jnp.log(s) - shifted_t                          # -log_softmax at target

    validf = valid.astype(jnp.float32)
    wt_valid = validf * w_t

    prob_ref[...] = jnp.where(valid, prob_t, 1.0)           # masked_fill_(~valid, 1)
    wrows_ref[0:1, :] = wt_valid
    wrows_ref[1:2, :] = wt_valid * nll_t


# ----------------------------------------------------------------------------
# Kernel 2: tiled OHEM selection + weighted sums (accumulated across the grid)
# ----------------------------------------------------------------------------
def _loss_kernel(thr_ref, prob_ref, wrows_ref, num_ref, den_ref):
    @pl.when(jnp.logical_and(pl.program_id(0) == 0, pl.program_id(1) == 0))
    def _():
        num_ref[...] = jnp.zeros_like(num_ref)
        den_ref[...] = jnp.zeros_like(den_ref)

    thr = thr_ref[0]                                        # SMEM scalar
    prob = prob_ref[...]                                    # (1, TN)
    wt_valid = wrows_ref[0:1, :]                            # (1, TN)
    wnll = wrows_ref[1:2, :]                                # (1, TN)
    kept = (prob <= thr).astype(jnp.float32)
    num_ref[...] += jnp.sum(kept * wnll)
    den_ref[...] += jnp.sum(kept * wt_valid)


# ----------------------------------------------------------------------------
# Wrapper
# ----------------------------------------------------------------------------
def ohem_cross_entropy_2d(pred_nchw, target_bhw, weight,
                          ignore_index=IGNORE_INDEX, thresh=THRESH,
                          min_kept=MIN_KEPT):
    b, c, h, w = pred_nchw.shape
    hw = h * w
    n = b * hw

    tile_n, hw_pad = _pick_tile(hw)
    num_tiles = hw_pad // tile_n

    # layout glue: NCHW -> (B, C, HW) is a free reshape (no transpose)
    pred3 = pred_nchw.reshape(b, c, hw)
    tgt3 = target_bhw.reshape(b, 1, hw).astype(jnp.int32)
    if hw_pad != hw:
        pred3 = jnp.pad(pred3, ((0, 0), (0, 0), (0, hw_pad - hw)))
        tgt3 = jnp.pad(tgt3, ((0, 0), (0, 0), (0, hw_pad - hw)),
                       constant_values=ignore_index)        # padded pixels are ignored
    wcol = weight.reshape(c, 1).astype(jnp.float32)

    prob_arr, wrows = pl.pallas_call(
        functools.partial(_stats_kernel, ignore_index=ignore_index),
        grid=(b, num_tiles),
        in_specs=[
            pl.BlockSpec((None, c, tile_n), lambda bi, ti: (bi, 0, ti)),
            pl.BlockSpec((None, 1, tile_n), lambda bi, ti: (bi, 0, ti)),
            pl.BlockSpec((c, 1), lambda bi, ti: (0, 0)),
        ],
        out_specs=[
            pl.BlockSpec((None, 1, tile_n), lambda bi, ti: (bi, 0, ti)),
            pl.BlockSpec((None, 2, tile_n), lambda bi, ti: (bi, 0, ti)),
        ],
        out_shape=[
            jax.ShapeDtypeStruct((b, 1, hw_pad), jnp.float32),
            jax.ShapeDtypeStruct((b, 2, hw_pad), jnp.float32),
        ],
        compiler_params=pltpu.CompilerParams(
            dimension_semantics=("parallel", "parallel")),
    )(pred3, tgt3, wcol)

    # valid-pixel count (cheap int reduction over the original targets)
    num_valid = jnp.sum(target_bhw.reshape(-1) != ignore_index)

    # OHEM threshold selection.
    # TODO(synk): k-th smallest order statistic has no clean Pallas equivalent;
    #             computed with jax.lax.top_k (partial selection) in plain JAX.
    if min_kept > 0:
        mask_prob_flat = prob_arr.reshape(-1)     # free reshape; padded entries are 1.0
        k = min(n, min_kept)
        neg_topk, _ = jax.lax.top_k(-mask_prob_flat, k)     # k smallest probs
        kth = -neg_topk[k - 1]
        ohem_thr = jnp.maximum(kth, jnp.float32(thresh))
        apply_ohem = (num_valid >= min_kept) & (num_valid > 0)
        eff_thr = jnp.where(apply_ohem, ohem_thr, jnp.float32(jnp.inf))
    else:
        # min_kept <= 0: the reference never builds a kept_mask -> keep all valid.
        eff_thr = jnp.float32(jnp.inf)
    thr_arr = jnp.reshape(eff_thr, (1,)).astype(jnp.float32)

    num, den = pl.pallas_call(
        _loss_kernel,
        grid=(b, num_tiles),
        in_specs=[
            pl.BlockSpec(memory_space=pltpu.SMEM),
            pl.BlockSpec((None, 1, tile_n), lambda bi, ti: (bi, 0, ti)),
            pl.BlockSpec((None, 2, tile_n), lambda bi, ti: (bi, 0, ti)),
        ],
        out_specs=[
            pl.BlockSpec((1, 1), lambda bi, ti: (0, 0)),
            pl.BlockSpec((1, 1), lambda bi, ti: (0, 0)),
        ],
        out_shape=[jax.ShapeDtypeStruct((1, 1), jnp.float32)] * 2,
        compiler_params=pltpu.CompilerParams(
            dimension_semantics=("arbitrary", "arbitrary")),
    )(thr_arr, prob_arr, wrows)

    # den == 0 (nothing kept / no valid pixels) yields NaN, matching the reference.
    return num[0, 0] / den[0, 0]


# ----------------------------------------------------------------------------
# Pure-JAX reference (mirrors the PyTorch module semantics)
# ----------------------------------------------------------------------------
def _reference(pred_nchw, target_bhw, weight,
               ignore_index=IGNORE_INDEX, thresh=THRESH, min_kept=MIN_KEPT):
    b, c, h, w = pred_nchw.shape
    n = b * h * w
    target = target_bhw.reshape(-1)
    valid = target != ignore_index
    tgt = jnp.where(valid, target, 0)
    num_valid = jnp.sum(valid)
    logits = jnp.transpose(pred_nchw, (0, 2, 3, 1)).reshape(n, c)
    prob = jax.nn.softmax(logits, axis=-1)
    mask_prob = jnp.where(valid, prob[jnp.arange(n), tgt], 1.0)
    sorted_p = jnp.sort(mask_prob)
    kth = sorted_p[min(n, min_kept) - 1]
    thr = jnp.where(kth > thresh, kth, jnp.float32(thresh))
    apply = (num_valid >= min_kept) & (num_valid > 0)
    eff = jnp.where(apply, thr, jnp.float32(jnp.inf))
    kept = valid & (mask_prob <= eff)
    logp = jax.nn.log_softmax(logits, axis=-1)
    nll = -logp[jnp.arange(n), tgt]
    wt = weight[tgt]
    keptf = kept.astype(jnp.float32)
    return jnp.sum(keptf * wt * nll) / jnp.sum(keptf * wt)


if __name__ == "__main__":
    key = jax.random.PRNGKey(0)
    k1, k2, k3 = jax.random.split(key, 3)

    B, C, H, W = 2, 7, 16, 16            # C=7 because use_weight=True fixes 7 classes
    pred = jax.random.normal(k1, (B, C, H, W), dtype=jnp.float32)
    tgt = jax.random.randint(k2, (B, H, W), 0, C, dtype=jnp.int32)
    ignore = jax.random.uniform(k3, (B, H, W)) < 0.1
    tgt = jnp.where(ignore, IGNORE_INDEX, tgt)

    # deterministic "use_weight=True" class weights from the module __init__
    weight = jnp.array([1, 2, 2, 2, 2, 2, 2], dtype=jnp.float32)

    loss = ohem_cross_entropy_2d(pred, tgt, weight)
    loss = jax.block_until_ready(loss)

    ref = _reference(pred, tgt, weight)
    np.testing.assert_allclose(np.asarray(loss), np.asarray(ref),
                               rtol=1e-5, atol=1e-5)
    print("KERNEL_OK")
</pallas_src>

<mosaic_0001>
module attributes {stable_mosaic.version = 11 : i64} {
  func.func @_stats_kernel(%arg0: i32, %arg1: i32, %arg2: memref<1x7x256xf32, #tpu.memory_space<vmem>>, %arg3: memref<1x1x256xi32, #tpu.memory_space<vmem>>, %arg4: memref<7x1xf32, #tpu.memory_space<vmem>>, %arg5: memref<1x1x256xf32, #tpu.memory_space<vmem>>, %arg6: memref<1x2x256xf32, #tpu.memory_space<vmem>>) attributes {dimension_semantics = [#tpu.dimension_semantics<parallel>, #tpu.dimension_semantics<parallel>], iteration_bounds = array<i64: 2, 1>, scalar_prefetch = 0 : i64, scratch_operands = 0 : i64, tpu.core_type = #tpu.core_type<tc>, window_params = [{transform_indices = @transform_0, window_bounds = array<i64: 1, 7, 256>}, {transform_indices = @transform_1, window_bounds = array<i64: 1, 1, 256>}, {pipeline_mode = #tpu.pipeline_mode<synchronous>, transform_indices = @transform_2, window_bounds = array<i64: 7, 1>}, {transform_indices = @transform_3, window_bounds = array<i64: 1, 1, 256>}, {transform_indices = @transform_4, window_bounds = array<i64: 1, 2, 256>}]} {
    %c0 = arith.constant 0 : index
    %c0_0 = arith.constant 0 : index
    %c0_1 = arith.constant 0 : index
    %0 = vector.load %arg2[%c0, %c0_0, %c0_1] : memref<1x7x256xf32, #tpu.memory_space<vmem>>, vector<1x7x256xf32>
    %1 = vector.shape_cast %0 : vector<1x7x256xf32> to vector<7x256xf32>
    %c0_2 = arith.constant 0 : index
    %c0_3 = arith.constant 0 : index
    %c0_4 = arith.constant 0 : index
    %2 = vector.load %arg3[%c0_2, %c0_3, %c0_4] : memref<1x1x256xi32, #tpu.memory_space<vmem>>, vector<1x1x256xi32>
    %3 = vector.shape_cast %2 : vector<1x1x256xi32> to vector<1x256xi32>
    %c-1_i32 = arith.constant -1 : i32
    %4 = vector.broadcast %c-1_i32 : i32 to vector<1x256xi32>
    %5 = arith.cmpi ne, %3, %4 : vector<1x256xi32>
    %c0_i32 = arith.constant 0 : i32
    %6 = vector.broadcast %c0_i32 : i32 to vector<1x256xi32>
    %7 = arith.select %5, %3, %6 : vector<1x256xi1>, vector<1x256xi32>
    %cst = arith.constant dense<0xFF800000> : vector<256xf32>
    %8 = vector.multi_reduction <maximumf>, %1, %cst [0] : vector<7x256xf32> to vector<256xf32>
    %9 = vector.shape_cast %8 : vector<256xf32> to vector<1x256xf32>
    %10 = vector.broadcast %9 : vector<1x256xf32> to vector<7x256xf32>
    %11 = arith.subf %1, %10 : vector<7x256xf32>
    %12 = math.exp %11 : vector<7x256xf32>
    %cst_5 = arith.constant dense<0.000000e+00> : vector<256xf32>
    %13 = vector.multi_reduction <add>, %12, %cst_5 [0] : vector<7x256xf32> to vector<256xf32>
    %14 = vector.shape_cast %13 : vector<256xf32> to vector<1x256xf32>
    %15 = tpu.iota {dimensions = array<i32: 0>} : vector<7x256xi32>
    %16 = vector.broadcast %7 : vector<1x256xi32> to vector<7x256xi32>
    %17 = arith.cmpi eq, %15, %16 : vector<7x256xi32>
    %18 = arith.extui %17 : vector<7x256xi1> to vector<7x256xi32>
    %19 = arith.sitofp %18 : vector<7x256xi32> to vector<7x256xf32>
    %20 = arith.mulf %11, %19 : vector<7x256xf32>
    %cst_6 = arith.constant dense<0.000000e+00> : vector<256xf32>
    %21 = vector.multi_reduction <add>, %20, %cst_6 [0] : vector<7x256xf32> to vector<256xf32>
    %22 = vector.shape_cast %21 : vector<256xf32> to vector<1x256xf32>
    %23 = arith.mulf %12, %19 : vector<7x256xf32>
    %cst_7 = arith.constant dense<0.000000e+00> : vector<256xf32>
    %24 = vector.multi_reduction <add>, %23, %cst_7 [0] : vector<7x256xf32> to vector<256xf32>
    %25 = vector.shape_cast %24 : vector<256xf32> to vector<1x256xf32>
    %c0_8 = arith.constant 0 : index
    %c0_9 = arith.constant 0 : index
    %26 = vector.load %arg4[%c0_8, %c0_9] : memref<7x1xf32, #tpu.memory_space<vmem>>, vector<7x1xf32>
    %27 = vector.broadcast %26 : vector<7x1xf32> to vector<7x256xf32>
    %28 = arith.mulf %27, %19 : vector<7x256xf32>
    %cst_10 = arith.constant dense<0.000000e+00> : vector<256xf32>
    %29 = vector.multi_reduction <add>, %28, %cst_10 [0] : vector<7x256xf32> to vector<256xf32>
    %30 = vector.shape_cast %29 : vector<256xf32> to vector<1x256xf32>
    %31 = arith.divf %25, %14 : vector<1x256xf32>
    %32 = math.log %14 : vector<1x256xf32>
    %33 = arith.subf %32, %22 : vector<1x256xf32>
    %34 = arith.extui %5 : vector<1x256xi1> to vector<1x256xi32>
    %35 = arith.sitofp %34 : vector<1x256xi32> to vector<1x256xf32>
    %36 = arith.mulf %35, %30 : vector<1x256xf32>
    %cst_11 = arith.constant 1.000000e+00 : f32
    %37 = vector.broadcast %cst_11 : f32 to vector<1x256xf32>
    %38 = arith.select %5, %31, %37 : vector<1x256xi1>, vector<1x256xf32>
    %c0_12 = arith.constant 0 : index
    %c0_13 = arith.constant 0 : index
    %c0_14 = arith.constant 0 : index
    %39 = vector.load %arg5[%c0_12, %c0_13, %c0_14] : memref<1x1x256xf32, #tpu.memory_space<vmem>>, vector<1x1x256xf32>
    %40 = vector.shape_cast %39 : vector<1x1x256xf32> to vector<1x256xf32>
    %41 = vector.shape_cast %38 : vector<1x256xf32> to vector<1x1x256xf32>
    tpu.vector_store %arg5[%c0_12, %c0_13, %c0_14], %41 {strides = array<i32>} : memref<1x1x256xf32, #tpu.memory_space<vmem>>, vector<1x1x256xf32>,
    %c0_15 = arith.constant 0 : index
    %c0_16 = arith.constant 0 : index
    %c0_17 = arith.constant 0 : index
    %42 = vector.load %arg6[%c0_15, %c0_16, %c0_17] : memref<1x2x256xf32, #tpu.memory_space<vmem>>, vector<1x1x256xf32>
    %43 = vector.shape_cast %42 : vector<1x1x256xf32> to vector<1x256xf32>
    %44 = vector.shape_cast %36 : vector<1x256xf32> to vector<1x1x256xf32>
    tpu.vector_store %arg6[%c0_15, %c0_16, %c0_17], %44 {strides = array<i32>} : memref<1x2x256xf32, #tpu.memory_space<vmem>>, vector<1x1x256xf32>,
    %45 = arith.mulf %36, %33 : vector<1x256xf32>
    %c0_18 = arith.constant 0 : index
    %c1 = arith.constant 1 : index
    %c0_19 = arith.constant 0 : index
    %46 = vector.load %arg6[%c0_18, %c1, %c0_19] : memref<1x2x256xf32, #tpu.memory_space<vmem>>, vector<1x1x256xf32>
    %47 = vector.shape_cast %46 : vector<1x1x256xf32> to vector<1x256xf32>
    %48 = vector.shape_cast %45 : vector<1x256xf32> to vector<1x1x256xf32>
    tpu.vector_store %arg6[%c0_18, %c1, %c0_19], %48 {strides = array<i32>} : memref<1x2x256xf32, #tpu.memory_space<vmem>>, vector<1x1x256xf32>,
    return
  }
  func.func @transform_0(%arg0: i32, %arg1: i32) -> (i32, i32, i32) {
    %c0_i32 = arith.constant 0 : i32
    %c0_i32_0 = arith.constant 0 : i32
    return %arg0, %c0_i32, %arg1 : i32, i32, i32
  }
  func.func @transform_1(%arg0: i32, %arg1: i32) -> (i32, i32, i32) {
    %c0_i32 = arith.constant 0 : i32
    %c0_i32_0 = arith.constant 0 : i32
    return %arg0, %c0_i32, %arg1 : i32, i32, i32
  }
  func.func @transform_2(%arg0: i32, %arg1: i32) -> (i32, i32) {
    %c0_i32 = arith.constant 0 : i32
    %c0_i32_0 = arith.constant 0 : i32
    %c0_i32_1 = arith.constant 0 : i32
    return %c0_i32, %c0_i32_0 : i32, i32
  }
  func.func @transform_3(%arg0: i32, %arg1: i32) -> (i32, i32, i32) {
    %c0_i32 = arith.constant 0 : i32
    %c0_i32_0 = arith.constant 0 : i32
    return %arg0, %c0_i32, %arg1 : i32, i32, i32
  }
  func.func @transform_4(%arg0: i32, %arg1: i32) -> (i32, i32, i32) {
    %c0_i32 = arith.constant 0 : i32
    %c0_i32_0 = arith.constant 0 : i32
    return %arg0, %c0_i32, %arg1 : i32, i32, i32
  }
}

</mosaic_0001>

<llo_original>
// kernel: tpu_custom_call.1
$region0: #{tpu_custom_call.1}
  #allocation0 [shape = 'u32[]', space=smem, size = 0x4, offset = 0x4, fixed_abs, tag = 'smem constant byte address 0x4 - core index']
  #allocation1 [shape = 'u32[72,128]{1,0:T(1,128)}', space=vmem, size = 0x9000, scoped, tag = 'internal scratch']
  %s0 = inlined_call_operand.vmem [shape: f32[2,7,256], index: 0, kind: input, shape index: {}]
  %s1 = inlined_call_operand.vmem [shape: s32[2,1,256], index: 1, kind: input, shape index: {}]
  %s2 = inlined_call_operand.vmem [shape: f32[7,1], index: 2, kind: input, shape index: {}]
  %s3 = inlined_call_operand.hbm [shape: f32[2,1,256], index: 3, kind: output, shape index: {0}]
  %s4 = inlined_call_operand.hbm [shape: f32[2,2,256], index: 4, kind: output, shape index: {1}]
  %5 = xla_tuple %s3, %s4
  %s6 = sld [smem:[#allocation0]]
  $region53: #{tpu_custom_call.1} parent=0
    _
  %s8 = ssub.s32 1, %s6
  %s9 = scalar_select 0, %s8, %s6
  $region1: #{tpu_custom_call.1} parent=0
    #allocation2 [shape = 'u8[2048]{0}', space=vmem, size = 0x800, scoped, tag = 'output window, operand 0']
    #allocation3 [shape = 's32[2]{0}', space=sflag, size = 0x8, scoped, tag = 'scoped memory for tpu_custom_call.1']
    #allocation4 [shape = 'u8[4096]{0}', space=vmem, size = 0x1000, scoped, tag = 'output window, operand 1']
    #allocation5 [shape = 's32[2]{0}', space=sflag, size = 0x8, scoped, tag = 'scoped memory for tpu_custom_call.1']
    %10 = vsyncpa [#allocation3], 0
    %s11 = scalar_lea.sflag [#allocation3], 1
    %12 = vsyncpa %s11, 0
    %13 = vsyncpa [#allocation5], 0
    %s14 = scalar_lea.sflag [#allocation5], 1
    %15 = vsyncpa %s14, 0
    loop: start=0, step=1, limit=4
    $region2: #{tpu_custom_call.1} parent=1 // loop_pre_header
      _
    $region3: #{tpu_custom_call.1} parent=1 // loop_header
      %s17 = sphi 0, %s21
      %p18 = scmp.ge.s32.totalorder %s17, 4
      %s24 = sphi 0, %s36
      %s25 = sphi 0, %s32
      %s26 = sphi 0, %s24
      %s27 = sphi 0, %s25
      %s28 = sphi 0, %s26
      %s29 = sphi 0, %s27
      %s41 = sphi 0, %s43
      %s44 = sphi 0, %s41
      %s45 = sphi 0, %s44
      %s61 = sphi 0, %s45
      %s69 = sphi 0, %s71
      %s72 = sphi 0, %s69
      %s73 = sphi 0, %s72
      %s89 = sphi 0, %s73
      %s93 = sphi 0, %s93
      %s95 = sphi 0, %s93
      %s96 = sphi 0, %s95
      %s110 = sphi 0, %s96
      %s118 = sphi 0, %s120
      %s121 = sphi 0, %s118
      %s122 = sphi 0, %s121
      %s138 = sphi 0, %s122
      %s146 = sphi 0, %s148
      %s149 = sphi 0, %s146
      %s150 = sphi 0, %s149
      %s166 = sphi 0, %s150
    $region4: #{tpu_custom_call.1} parent=1 // loop_header_branch
      %20 = sbr.rel (%p18) target = $region8
    $region5: #{tpu_custom_call.1} parent=1 // loop_body
      %s22 = ssub.s32 %s17, 1
      %s23 = ssub.s32 %s17, 2
      %s30 = sadd.s32 1, %s25
      %p31 = scmp.ge.s32.totalorder %s30, 1
      %s32 = scalar_select %p31, 0, %s30
      %s33 = sadd.s32 1, %s24
      %s34 = scalar_select %p31, %s33, %s24
      %p35 = scmp.ge.s32.totalorder %s34, 2
      %s36 = scalar_select %p35, 0, %s34
      %s37 = ssub.s32 %s24, %s36
      %s38 = ssub.s32 %s25, %s32
      %s39 = sor.u32 %s37, %s38
      %p40 = scmp.eq.s32.totalorder %s39, 0
      %s42 = sadd.s32 %s41, 1
      %s43 = scalar_select %p40, %s41, %s42
      %p46 = pneg %p40
      %p47 = scmp.eq.s32.totalorder %s17, 1
      %p48 = por %p46, %p47
      %p49 = scmp.ne.s32.totalorder %s41, %s44
      %p50 = scmp.eq.s32.totalorder %s17, 0
      %p51 = por %p49, %p50
      %p52 = scmp.ne.s32.totalorder %s41, %s44
      %p53 = scmp.eq.s32.totalorder %s22, 1
      %p54 = por %p52, %p53
      %p55 = scmp.ne.s32.totalorder %s44, %s45
      %p56 = scmp.eq.s32.totalorder %s22, 0
      %p57 = por %p55, %p56
      %p58 = scmp.ne.s32.totalorder %s44, %s45
      %p59 = scmp.eq.s32.totalorder %s23, 1
      %p60 = por %p58, %p59
      %p62 = scmp.ne.s32.totalorder %s45, %s61
      %p63 = scmp.eq.s32.totalorder %s23, 0
      %p64 = por %p62, %p63
      %s65 = ssub.s32 %s24, %s36
      %s66 = ssub.s32 %s25, %s32
      %s67 = sor.u32 %s65, %s66
      %p68 = scmp.eq.s32.totalorder %s67, 0
      %s70 = sadd.s32 %s69, 1
      %s71 = scalar_select %p68, %s69, %s70
      %p74 = pneg %p68
      %p75 = scmp.eq.s32.totalorder %s17, 1
      %p76 = por %p74, %p75
      %p77 = scmp.ne.s32.totalorder %s69, %s72
      %p78 = scmp.eq.s32.totalorder %s17, 0
      %p79 = por %p77, %p78
      %p80 = scmp.ne.s32.totalorder %s69, %s72
      %p81 = scmp.eq.s32.totalorder %s22, 1
      %p82 = por %p80, %p81
      %p83 = scmp.ne.s32.totalorder %s72, %s73
      %p84 = scmp.eq.s32.totalorder %s22, 0
      %p85 = por %p83, %p84
      %p86 = scmp.ne.s32.totalorder %s72, %s73
      %p87 = scmp.eq.s32.totalorder %s23, 1
      %p88 = por %p86, %p87
      %p90 = scmp.ne.s32.totalorder %s73, %s89
      %p91 = scmp.eq.s32.totalorder %s23, 0
      %p92 = por %p90, %p91
      %s94 = sadd.s32 %s93, 1
      %p97 = scmp.eq.s32.totalorder %s17, 1
      %p98 = scmp.ne.s32.totalorder %s93, %s95
      %p99 = scmp.eq.s32.totalorder %s17, 0
      %p100 = por %p98, %p99
      %p101 = scmp.ne.s32.totalorder %s93, %s95
      %p102 = scmp.eq.s32.totalorder %s22, 1
      %p103 = por %p101, %p102
      %p104 = scmp.ne.s32.totalorder %s95, %s96
      %p105 = scmp.eq.s32.totalorder %s22, 0
      %p106 = por %p104, %p105
      %p107 = scmp.ne.s32.totalorder %s95, %s96
      %p108 = scmp.eq.s32.totalorder %s23, 1
      %p109 = por %p107, %p108
      %p111 = scmp.ne.s32.totalorder %s96, %s110
      %p112 = scmp.eq.s32.totalorder %s23, 0
      %p113 = por %p111, %p112
      %s114 = ssub.s32 %s24, %s36
      %s115 = ssub.s32 %s25, %s32
      %s116 = sor.u32 %s114, %s115
      %p117 = scmp.eq.s32.totalorder %s116, 0
      %s119 = sadd.s32 %s118, 1
      %s120 = scalar_select %p117, %s118, %s119
      %p123 = pneg %p117
      %p124 = scmp.eq.s32.totalorder %s17, 1
      %p125 = por %p123, %p124
      %p126 = scmp.ne.s32.totalorder %s118, %s121
      %p127 = scmp.eq.s32.totalorder %s17, 0
      %p128 = por %p126, %p127
      %p129 = scmp.ne.s32.totalorder %s118, %s121
      %p130 = scmp.eq.s32.totalorder %s22, 1
      %p131 = por %p129, %p130
      %p132 = scmp.ne.s32.totalorder %s121, %s122
      %p133 = scmp.eq.s32.totalorder %s22, 0
      %p134 = por %p132, %p133
      %p135 = scmp.ne.s32.totalorder %s121, %s122
      %p136 = scmp.eq.s32.totalorder %s23, 1
      %p137 = por %p135, %p136
      %p139 = scmp.ne.s32.totalorder %s122, %s138
      %p140 = scmp.eq.s32.totalorder %s23, 0
      %p141 = por %p139, %p140
      %s142 = ssub.s32 %s24, %s36
      %s143 = ssub.s32 %s25, %s32
      %s144 = sor.u32 %s142, %s143
      %p145 = scmp.eq.s32.totalorder %s144, 0
      %s147 = sadd.s32 %s146, 1
      %s148 = scalar_select %p145, %s146, %s147
      %p151 = pneg %p145
      %p152 = scmp.eq.s32.totalorder %s17, 1
      %p153 = por %p151, %p152
      %p154 = scmp.ne.s32.totalorder %s146, %s149
      %p155 = scmp.eq.s32.totalorder %s17, 0
      %p156 = por %p154, %p155
      %p157 = scmp.ne.s32.totalorder %s146, %s149
      %p158 = scmp.eq.s32.totalorder %s22, 1
      %p159 = por %p157, %p158
      %p160 = scmp.ne.s32.totalorder %s149, %s150
      %p161 = scmp.eq.s32.totalorder %s22, 0
      %p162 = por %p160, %p161
      %p163 = scmp.ne.s32.totalorder %s149, %s150
      %p164 = scmp.eq.s32.totalorder %s23, 1
      %p165 = por %p163, %p164
      %p167 = scmp.ne.s32.totalorder %s150, %s166
      %p168 = scmp.eq.s32.totalorder %s23, 0
      %p169 = por %p167, %p168
      %p170 = scmp.le.s32.totalorder 1, %s17
      %p171 = scmp.lt.s32.totalorder %s17, 3
      %p172 = pnand %p170, %p171
      %p173 = pneg %p172
      // Predicated region
      $region9: #{tpu_custom_call.1} parent=5 // pred_check
        _
      $region10: #{tpu_custom_call.1} parent=5 // pred_check_branch
        %175 = sbr.rel (%p172) target = $region12
      $region11: #{tpu_custom_call.1} parent=5 // pred_region
        %s176 = ssub.s32 %s17, 1
        // Predicated region
        $region13: #{tpu_custom_call.1} parent=11 // pred_check
          %p177 = pneg %p106
        $region14: #{tpu_custom_call.1} parent=11 // pred_check_branch
          %179 = sbr.rel (%p177) target = $region16
        $region15: #{tpu_custom_call.1} parent=11 // pred_region
          _
        $region16: #{tpu_custom_call.1} parent=11 // pred_fallthru
          _
      $region12: #{tpu_custom_call.1} parent=5 // pred_fallthru
        _
      %p180 = scmp.lt.s32.totalorder %s17, 2
      // Predicated region
      $region17: #{tpu_custom_call.1} parent=5 // pred_check
        %p181 = pneg %p180
      $region18: #{tpu_custom_call.1} parent=5 // pred_check_branch
        %183 = sbr.rel (%p181) target = $region20
      $region19: #{tpu_custom_call.1} parent=5 // pred_region
        // Predicated region
        $region21: #{tpu_custom_call.1} parent=19 // pred_check
          %p184 = pneg %p51
        $region22: #{tpu_custom_call.1} parent=19 // pred_check_branch
          %186 = sbr.rel (%p184) target = $region24
        $region23: #{tpu_custom_call.1} parent=19 // pred_region
          %s187 = smul.u32 2, %s25
          %p188 = scmp.lt.s32.totalorder %s24, 1
          %s189 = scalar_select %p188, %s24, 1
          %p190 = scmp.lt.s32.totalorder %s187, 1
          %s191 = scalar_select %p190, %s187, 1
          %s192 = smul.addr %s189, 2
          %s193 = sadd.s32 %s191, %s192
          %s194 = smul.addr %s193, 8
          %s195 = scalar_lea.vmem %s0, %s194
          %s196 = smul.u32 2, %s25
        $region24: #{tpu_custom_call.1} parent=19 // pred_fallthru
          _
        // Predicated region
        $region25: #{tpu_custom_call.1} parent=19 // pred_check
          %p197 = pneg %p79
        $region26: #{tpu_custom_call.1} parent=19 // pred_check_branch
          %199 = sbr.rel (%p197) target = $region28
        $region27: #{tpu_custom_call.1} parent=19 // pred_region
          %s200 = smul.u32 2, %s25
          %p201 = scmp.lt.s32.totalorder %s24, 1
          %s202 = scalar_select %p201, %s24, 1
          %p203 = scmp.lt.s32.totalorder %s200, 1
          %s204 = scalar_select %p203, %s200, 1
          %s205 = smul.addr %s202, 2
          %s206 = sadd.s32 %s204, %s205
          %s207 = scalar_lea.vmem %s1, %s206
          %s208 = smul.u32 2, %s25
        $region28: #{tpu_custom_call.1} parent=19 // pred_fallthru
          _
      $region20: #{tpu_custom_call.1} parent=5 // pred_fallthru
        _
      %p209 = scmp.le.s32.totalorder 1, %s17
      %p210 = scmp.lt.s32.totalorder %s17, 3
      %p211 = pnand %p209, %p210
      %p212 = pneg %p211
      // Predicated region
      $region29: #{tpu_custom_call.1} parent=5 // pred_check
        _
      $region30: #{tpu_custom_call.1} parent=5 // pred_check_branch
        %214 = sbr.rel (%p211) target = $region32
      $region31: #{tpu_custom_call.1} parent=5 // pred_region
        %s215 = ssub.s32 %s17, 1
        %s216 = smul.u32 2, %s27
        %p217 = scmp.lt.s32.totalorder %s26, 1
        %s218 = scalar_select %p217, %s26, 1
        %p219 = scmp.lt.s32.totalorder %s216, 1
        %s220 = scalar_select %p219, %s216, 1
        %s221 = smul.addr %s218, 2
        %s222 = sadd.s32 %s220, %s221
        %s223 = smul.addr %s222, 8
        %s224 = scalar_lea.vmem %s0, %s223
        %p225 = pneg %p57
        %p226 = pneg %p54
        %s227 = smul.u32 2, %s27
        %p228 = scmp.lt.s32.totalorder %s26, 1
        %s229 = scalar_select %p228, %s26, 1
        %p230 = scmp.lt.s32.totalorder %s227, 1
        %s231 = scalar_select %p230, %s227, 1
        %s232 = smul.addr %s229, 2
        %s233 = sadd.s32 %s231, %s232
        %s234 = scalar_lea.vmem %s1, %s233
        %p235 = pneg %p85
        %p236 = pneg %p82
        %p237 = pneg %p106
        %p238 = pneg %p103
        %p239 = pneg %p134
        %p240 = pneg %p131
        %s241 = sand.u32 %s121, 1
        %s242 = scalar_lea.sflag [#allocation3], %s241
        %s243 = sand.u32 %s121, 1
        %s244 = smul.addr %s243, 2
        %s245 = scalar_lea.vmem [#allocation2], %s244
        %p246 = pneg %p162
        %p247 = pneg %p159
        %s248 = sand.u32 %s149, 1
        %s249 = scalar_lea.sflag [#allocation5], %s248
        %s250 = sand.u32 %s149, 1
        %s251 = smul.addr %s250, 4
        %s252 = scalar_lea.vmem [#allocation4], %s251
        %s253 = smul.u32 2, %s27
        %p254 = scmp.lt.s32.totalorder %s26, 1
        %s255 = scalar_select %p254, %s26, 1
        %p256 = scmp.lt.s32.totalorder %s253, 1
        %s257 = scalar_select %p256, %s253, 1
        %s258 = smul.addr %s255, 2
        %s259 = sadd.s32 %s257, %s258
        %s260 = smul.addr %s259, 8
        %s261 = scalar_lea.vmem %s0, %s260
        %s262 = smul.u32 2, %s27
        %s263 = smul.u32 2, %s27
        %p264 = scmp.lt.s32.totalorder %s26, 1
        %s265 = scalar_select %p264, %s26, 1
        %p266 = scmp.lt.s32.totalorder %s263, 1
        %s267 = scalar_select %p266, %s263, 1
        %s268 = smul.addr %s265, 2
        %s269 = sadd.s32 %s267, %s268
        %s270 = scalar_lea.vmem %s1, %s269
        %s271 = smul.u32 2, %s27
        %s272 = smul.u32 2, %s27
        %s273 = smul.u32 2, %s27
        %v274 = vld [vmem:[%s261] sm:$0x7f]
        %v275 = vld [vmem:[%s261 + $0x8] sm:$0x7f]
        %v276 = vld [vmem:[%s270] sm:$0x3]
        %vm277 = vcmp.ne.s32.totalorder %v276, 4294967295
        %v278 = vsel %vm277, %v276, 0
        %vm279 = vcmask 1046528
        %v280 = vsel %vm279, %v274, -inf
        %v281 = vrot.slane %v280, 4
        %v282 = vmax.f32 %v280, %v281
        %v283 = vrot.slane %v282, 2
        %v284 = vmax.f32 %v282, %v283
        %v285 = vrot.slane %v284, 1
        %v286 = vmax.f32 %v284, %v285
        %v287 = vsel %vm279, %v275, -inf
        %v288 = vrot.slane %v287, 4
        %v289 = vmax.f32 %v287, %v288
        %v290 = vrot.slane %v289, 2
        %v291 = vmax.f32 %v289, %v290
        %v292 = vrot.slane %v291, 1
        %v293 = vmax.f32 %v291, %v292
        %v294 = vsub.f32 %v274, %v286
        %v295 = vsub.f32 %v275, %v293
        %v296 = vmul.f32 %v294, 1.442695
        %v297 = vpow.pop %v296
        %v298 = vmul.f32 %v295, 1.442695
        %v299 = vpow.pop %v298
        %v300 = vsel %vm279, %v297, 0.0
        %v301 = vrot.slane %v300, 4
        %v302 = vadd.f32 %v300, %v301
        %v303 = vrot.slane %v302, 2
        %v304 = vadd.f32 %v302, %v303
        %v305 = vrot.slane %v304, 1
        %v306 = vadd.f32 %v304, %v305
        %v307 = vsel %vm279, %v299, 0.0
        %v308 = vrot.slane %v307, 4
        %v309 = vadd.f32 %v307, %v308
        %v310 = vrot.slane %v309, 2
        %v311 = vadd.f32 %v309, %v310
        %v312 = vrot.slane %v311, 1
        %v313 = vadd.f32 %v311, %v312
        %v314 = vlaneseq
        %v315 = vshrl.u32 %v314, 7
        %v316 = vperm.slane %v278, 0
        %v317 = vperm.slane %v278, 1
        %vm318 = vcmp.eq.s32.totalorder %v315, %v316
        %vm319 = vcmp.eq.s32.totalorder %v315, %v317
        %v320 = vsel %vm318, 1, 0
        %v321 = vsel %vm319, 1, 0
        %v322 = vcvt.s32.f32 %v320
        %v323 = vcvt.s32.f32 %v321
        %v324 = vmul.f32 %v294, %v322
        %v325 = vmul.f32 %v295, %v323
        %v326 = vsel %vm279, %v324, 0.0
        %v327 = vrot.slane %v326, 4
        %v328 = vadd.f32 %v326, %v327
        %v329 = vrot.slane %v328, 2
        %v330 = vadd.f32 %v328, %v329
        %v331 = vrot.slane %v330, 1
        %v332 = vadd.f32 %v330, %v331
        %v333 = vsel %vm279, %v325, 0.0
        %v334 = vrot.slane %v333, 4
        %v335 = vadd.f32 %v333, %v334
        %v336 = vrot.slane %v335, 2
        %v337 = vadd.f32 %v335, %v336
        %v338 = vrot.slane %v337, 1
        %v339 = vadd.f32 %v337, %v338
        %v340 = vmul.f32 %v297, %v322
        %v341 = vmul.f32 %v299, %v323
        %v342 = vsel %vm279, %v340, 0.0
        %v343 = vrot.slane %v342, 4
        %v344 = vadd.f32 %v342, %v343
        %v345 = vrot.slane %v344, 2
        %v346 = vadd.f32 %v344, %v345
        %v347 = vrot.slane %v346, 1
        %v348 = vadd.f32 %v346, %v347
        %v349 = vsel %vm279, %v341, 0.0
        %v350 = vrot.slane %v349, 4
        %v351 = vadd.f32 %v349, %v350
        %v352 = vrot.slane %v351, 2
        %v353 = vadd.f32 %v351, %v352
        %v354 = vrot.slane %v353, 1
        %v355 = vadd.f32 %v353, %v354
        %v356 = vld [vmem:[%s2] sm:$0x7f]
        %358 = vset.pattern.permute.xlu0 0
        %359 = vperm.xlu0 %358, %v356
        %v360 = vpop.permute.xlu0 %359
        %v362 = vmul.f32 %v360, %v322
        %v363 = vmul.f32 %v360, %v323
        %v364 = vsel %vm279, %v362, 0.0
        %v365 = vrot.slane %v364, 4
        %v366 = vadd.f32 %v364, %v365
        %v367 = vrot.slane %v366, 2
        %v368 = vadd.f32 %v366, %v367
        %v369 = vrot.slane %v368, 1
        %v370 = vadd.f32 %v368, %v369
        %v371 = vsel %vm279, %v363, 0.0
        %v372 = vrot.slane %v371, 4
        %v373 = vadd.f32 %v371, %v372
        %v374 = vrot.slane %v373, 2
        %v375 = vadd.f32 %v373, %v374
        %v376 = vrot.slane %v375, 1
        %v377 = vadd.f32 %v375, %v376
        %v378 = vrcp.pop %v306
        %v379 = vmul.f32 %v306, %v378
        %v380 = vsub.f32 1.0, %v379
        %v381 = vmul.f32 %v378, %v380
        %v382 = vadd.f32 %v378, %v381
        %vm383 = vweird.f32 %v306
        %vm384 = vweird.f32 %v378
        %vm385 = vmor %vm383, %vm384
        %v386 = vsel %vm385, %v378, %v382
        %v387 = vand.u32 2147483647, %v306
        %vm388 = vcmp.eq.f32.partialorder %v387, 8.507059e+37
        %v389 = vand.u32 %v306, 2147483648
        %v390 = vor.u32 1.1754944e-38, %v389
        %v391 = vsel %vm388, %v390, %v386
        %v392 = vmul.f32 %v348, %v391
        %v393 = vrcp.pop %v313
        %v394 = vmul.f32 %v313, %v393
        %v395 = vsub.f32 1.0, %v394
        %v396 = vmul.f32 %v393, %v395
        %v397 = vadd.f32 %v393, %v396
        %vm398 = vweird.f32 %v313
        %vm399 = vweird.f32 %v393
        %vm400 = vmor %vm398, %vm399
        %v401 = vsel %vm400, %v393, %v397
        %v402 = vand.u32 2147483647, %v313
        %vm403 = vcmp.eq.f32.partialorder %v402, 8.507059e+37
        %v404 = vand.u32 %v313, 2147483648
        %v405 = vor.u32 1.1754944e-38, %v404
        %v406 = vsel %vm403, %v405, %v401
        %v407 = vmul.f32 %v355, %v406
        %v408 = vlog2.pop %v306
        %v409 = vmul.f32 %v408, 0.6931472
        %v410 = vlog2.pop %v313
        %v411 = vmul.f32 %v410, 0.6931472
        %v412 = vsub.f32 %v409, %v332
        %v413 = vsub.f32 %v411, %v339
        %v414 = vsel %vm277, 1, 0
        %v415 = vcvt.s32.f32 %v414
        %v418 = vrot.slane %v377, 7
        %vm419 = vcmask 1040384
        %v420 = vsel %vm419, %v370, %v418
        %v422 = vmul.f32 %v415, %v420
        %v425 = vrot.slane %v407, 7
        %v426 = vsel %vm419, %v392, %v425
        %v428 = vsel %vm277, %v426, 1.0
        %v429 = vlaneseq
        %vm430 = vcmp.ge.s32.totalorder %v429, 0
        %vm431 = vcmp.lt.s32.totalorder %v429, 256
        %vm432 = vmand %vm430, %vm431
        %433 = vst.msk [vmem:[%s245] sm:$0x3] %vm432, %v428
        %434 = vst.msk [vmem:[%s252] ss:$2 sm:$0x3] %vm432, %v422
        %v437 = vrot.slane %v413, 7
        %v438 = vsel %vm419, %v412, %v437
        %v440 = vmul.f32 %v422, %v438
        %s441 = scalar_lea.vmem %s252, 1 [#allocation4]
        %442 = vst.msk [vmem:[%s441] ss:$2 sm:$0x3] %vm432, %v440
        %s443 = sand.u32 %s121, 1
        %s444 = scalar_lea.sflag [#allocation3], %s443
        %s445 = sand.u32 %s121, 1
        %s446 = smul.addr %s445, 2
        %s447 = scalar_lea.vmem [#allocation2], %s446
        %s448 = sand.u32 %s149, 1
        %s449 = scalar_lea.sflag [#allocation5], %s448
        %s450 = sand.u32 %s149, 1
        %s451 = smul.addr %s450, 4
        %s452 = scalar_lea.vmem [#allocation4], %s451
        // Predicated region
        $region33: #{tpu_custom_call.1} parent=31 // pred_check
          %p453 = pneg %p131
        $region34: #{tpu_custom_call.1} parent=31 // pred_check_branch
          %455 = sbr.rel (%p453) target = $region36
        $region35: #{tpu_custom_call.1} parent=31 // pred_region
          %s456 = smul.u32 2, %s27
          %458 = vsyncadd %s444, 0
          %s459 = smul.addr %s26, 2
          %s460 = sadd.s32 %s456, %s459
          %s461 = scalar_lea.hbm %s3, %s460
          %s463 = sshll.u32 %s447, 4
          %s464 = int_to_ptr.vmem [resolvable:$true] %s463
          %s465 = sshll.u32 %s461, 4
          %s466 = int_to_ptr.hbm [resolvable:$true] %s465
          %468 = dma.vmem_to_hbm [thread:$0]  %s464, 32, %s466, %s444
        $region36: #{tpu_custom_call.1} parent=31 // pred_fallthru
          _
        // Predicated region
        $region37: #{tpu_custom_call.1} parent=31 // pred_check
          %p469 = pneg %p159
        $region38: #{tpu_custom_call.1} parent=31 // pred_check_branch
          %471 = sbr.rel (%p469) target = $region40
        $region39: #{tpu_custom_call.1} parent=31 // pred_region
          %s472 = smul.u32 2, %s27
          %474 = vsyncadd %s449, 0
          %s475 = smul.addr %s26, 2
          %s476 = sadd.s32 %s472, %s475
          %s477 = smul.addr %s476, 2
          %s478 = scalar_lea.hbm %s4, %s477
          %s480 = sshll.u32 %s452, 4
          %s481 = int_to_ptr.vmem [resolvable:$true] %s480
          %s482 = sshll.u32 %s478, 4
          %s483 = int_to_ptr.hbm [resolvable:$true] %s482
          %485 = dma.vmem_to_hbm [thread:$0]  %s481, 64, %s483, %s449
        $region40: #{tpu_custom_call.1} parent=31 // pred_fallthru
          _
      $region32: #{tpu_custom_call.1} parent=5 // pred_fallthru
        _
      %p486 = scmp.le.s32.totalorder 2, %s17
      // Predicated region
      $region41: #{tpu_custom_call.1} parent=5 // pred_check
        %p487 = pneg %p486
      $region42: #{tpu_custom_call.1} parent=5 // pred_check_branch
        %489 = sbr.rel (%p487) target = $region44
      $region43: #{tpu_custom_call.1} parent=5 // pred_region
        %s490 = ssub.s32 %s17, 2
        // Predicated region
        $region45: #{tpu_custom_call.1} parent=43 // pred_check
          %p491 = pneg %p137
        $region46: #{tpu_custom_call.1} parent=43 // pred_check_branch
          %493 = sbr.rel (%p491) target = $region48
        $region47: #{tpu_custom_call.1} parent=43 // pred_region
          %s494 = sand.u32 %s122, 1
          %s495 = scalar_lea.sflag [#allocation3], %s494
          %s496 = sand.u32 %s122, 1
          %s497 = smul.addr %s496, 2
          %s498 = scalar_lea.vmem [#allocation2], %s497
          %500 = dma.done %s495, 32
        $region48: #{tpu_custom_call.1} parent=43 // pred_fallthru
          _
        // Predicated region
        $region49: #{tpu_custom_call.1} parent=43 // pred_check
          %p501 = pneg %p165
        $region50: #{tpu_custom_call.1} parent=43 // pred_check_branch
          %503 = sbr.rel (%p501) target = $region52
        $region51: #{tpu_custom_call.1} parent=43 // pred_region
          %s504 = sand.u32 %s150, 1
          %s505 = scalar_lea.sflag [#allocation5], %s504
          %s506 = sand.u32 %s150, 1
          %s507 = smul.addr %s506, 4
          %s508 = scalar_lea.vmem [#allocation4], %s507
          %510 = dma.done %s505, 64
        $region52: #{tpu_custom_call.1} parent=43 // pred_fallthru
          _
      $region44: #{tpu_custom_call.1} parent=5 // pred_fallthru
        _
    $region6: #{tpu_custom_call.1} parent=1 // loop_footer
      %s21 = sadd.s32 1, %s17
    $region7: #{tpu_custom_call.1} parent=1 // loop_footer_branch
      %16 = sbr.rel target = $region3
    $region8: #{tpu_custom_call.1} parent=1 // loop_exit
      _
    %511 = vsyncpa [#allocation3], 1
    %s512 = scalar_lea.sflag [#allocation3], 1
    %513 = vsyncpa %s512, 1
    %514 = vsyncpa [#allocation5], 1
    %s515 = scalar_lea.sflag [#allocation5], 1
    %516 = vsyncpa %s515, 1

</llo_original>
